<compile_context>
chip_gen: v5e
topology: v5e:2x2
jax: 0.10.0
libtpu: 0.0.40
codegen_flags: <defaults>
</compile_context>

<pallas_src>
import jax
import jax.numpy as jnp
import numpy as np
from jax import lax
from jax.experimental import pallas as pl
from jax.experimental.pallas import tpu as pltpu

MASK_MOLD_FILTERS = 64
KH = KW = 7
CIN = 3
K = KH * KW * CIN          # 147 contraction elements per patch
CONV_STRIDE = 2
CONV_PAD = 3
POOL_K = 3
POOL_STRIDE = 2
POOL_PAD = 1
BN_EPS = 1e-5


def _round_up(x, m):
    return (x + m - 1) // m * m


# ----------------------------- Pallas kernels ------------------------------ #

def _conv_bn_relu_kernel(p_ref, w_ref, shift_ref, o_ref):
    # p_ref:     (TM2, 2K)  bf16 -- two im2col patch rows packed per kernel row
    # w_ref:     (2K, 128)  bf16 -- block-diag [[W*bn_scale, 0], [0, W*bn_scale]]
    # shift_ref: (1, 128)   f32  -- folded BN shift, duplicated for both halves
    # o_ref:     (TM2, 128) f32  -- [conv(row 2r) | conv(row 2r+1)], lane-dense
    acc = jnp.dot(p_ref[...], w_ref[...], preferred_element_type=jnp.float32)
    o_ref[...] = jnp.maximum(acc + shift_ref[...], 0.0).astype(o_ref.dtype)


def _maxpool_kernel(y_ref, o_ref, lft_ref, top_ref):
    # y_ref: (Ho, Wo2, 128) f32 lane-merged, post-ReLU (>= 0) conv output:
    #        lanes [0:64)   = channels of spatial column 2*w2
    #        lanes [64:128) = channels of spatial column 2*w2 + 1
    # o_ref: (Ho2, Wo2, 64) f32 pooled output (k=3, s=2, p=1)
    # lft_ref/top_ref: small VMEM scratch used to build the shifted taps.
    ho2, wo2, c = o_ref.shape

    ctr = y_ref[:, :, :c]                    # column 2*w2         (Ho, Wo2, C)
    rgt = y_ref[:, :, c:]                    # column 2*w2 + 1     (Ho, Wo2, C)
    m = jnp.maximum(ctr, rgt)

    # Left tap (column 2*w2 - 1): `rgt` shifted by one pooled column.  The pool
    # padding column becomes 0, which equals the module's -inf padding because
    # all inputs are ReLU'd (>= 0).
    lft_ref[...] = jnp.zeros_like(lft_ref)
    if wo2 > 1:
        lft_ref[:, 1:, :] = rgt[:, :wo2 - 1, :]
    cm = jnp.maximum(m, lft_ref[...])        # max over 3 columns   (Ho, Wo2, C)

    # Rows {2p-1, 2p, 2p+1}: split the (untiled) row dim into even/odd -- free.
    cm = cm.reshape(ho2, 2, wo2, c)
    even = cm[:, 0]                          # row 2p
    odd = cm[:, 1]                           # row 2p + 1
    r = jnp.maximum(even, odd)
    top_ref[...] = jnp.zeros_like(top_ref)   # row -1 (padding) -> 0
    if ho2 > 1:
        top_ref[1:] = odd[:ho2 - 1]          # row 2p - 1
    o_ref[...] = jnp.maximum(r, top_ref[...]).astype(o_ref.dtype)


# ------------------------------- glue / wrapper ----------------------------- #

def _im2col(x_nhwc):
    """Extract 7x7/stride-2/pad-3 patches, flattened in (kh, kw, cin) order."""
    n, h, w, c = x_nhwc.shape
    ho = (h + 2 * CONV_PAD - KH) // CONV_STRIDE + 1
    wo = (w + 2 * CONV_PAD - KW) // CONV_STRIDE + 1
    xp = jnp.pad(x_nhwc, ((0, 0), (CONV_PAD, CONV_PAD),
                          (CONV_PAD, CONV_PAD), (0, 0)))
    taps = []
    for kh in range(KH):
        for kw in range(KW):
            taps.append(lax.slice(
                xp, (0, kh, kw, 0),
                (n, kh + CONV_STRIDE * (ho - 1) + 1,
                 kw + CONV_STRIDE * (wo - 1) + 1, c),
                (1, CONV_STRIDE, CONV_STRIDE, 1)))      # (N, Ho, Wo, C)
    patches = jnp.stack(taps, axis=3)                    # (N, Ho, Wo, 49, C)
    patches = patches.reshape(n, ho, wo, KH * KW * c)    # k-order = (kh, kw, cin)
    return patches.reshape(n * ho * wo, KH * KW * c), ho, wo


def init_params(key, filters=MASK_MOLD_FILTERS):
    """Deterministic synthetic parameters (shapes match the nn.Module __init__)."""
    k1, k2, k3, k4, k5 = jax.random.split(key, 5)
    # PyTorch conv weight layout: (Cout, Cin, KH, KW), bias=False.
    w_torch = jax.random.normal(k1, (filters, CIN, KH, KW), jnp.float32) * 0.05
    # reorder to (KH, KW, Cin, Cout) then flatten K for the im2col matmul.
    w_mat = jnp.transpose(w_torch, (2, 3, 1, 0)).reshape(K, filters)
    gamma = 1.0 + 0.1 * jax.random.normal(k2, (filters,), jnp.float32)
    beta = 0.1 * jax.random.normal(k3, (filters,), jnp.float32)
    running_mean = 0.1 * jax.random.normal(k4, (filters,), jnp.float32)
    running_var = jnp.abs(jax.random.normal(k5, (filters,), jnp.float32)) + 0.5
    return dict(w_torch=w_torch, w_mat=w_mat, gamma=gamma, beta=beta,
                running_mean=running_mean, running_var=running_var)


def mold_mask_inputs_vrb_forward(person_nchw, obj_nchw, params, targets=None,
                                 tile_m2=512):
    # TODO(synk): only the default mask_mold_ablation=False path is implemented;
    # training-mode BatchNorm (batch stats + running-stat update) is replaced by
    # eval-mode folded BN.
    n, _, h, w = person_nchw.shape
    assert h % 4 == 0 and w % 4 == 0, "kernel assumes H and W divisible by 4"
    c_out = params["w_mat"].shape[1]

    combined = person_nchw + obj_nchw
    soft_mask_nchw = jnp.concatenate([person_nchw, obj_nchw, combined], axis=1)
    # NCHW -> NHWC, bf16 (halves im2col HBM bytes, native MXU input dtype).
    x = jnp.transpose(soft_mask_nchw, (0, 2, 3, 1)).astype(jnp.bfloat16)

    # TODO(synk): im2col patches are still materialized in HBM (bf16); in-kernel
    # patch extraction from a row band with a 7-row halo would cut HBM reads
    # further.
    patches, ho, wo = _im2col(x)                     # (M, 147) bf16
    m = patches.shape[0]
    m2 = m // 2                                      # Wo is even -> M is even
    wo2 = wo // 2
    ho2 = ho // 2
    # Pack two consecutive patch rows per kernel row -> 128-lane-dense output.
    patches2 = patches.reshape(m2, 2 * K)            # free (row-major compatible)

    # Fold eval-mode BN scale into the conv weights; build block-diag weights so
    # one matmul yields [conv(row 2r) | conv(row 2r+1)] in 128 lanes.
    scale = params["gamma"] / jnp.sqrt(params["running_var"] + BN_EPS)
    shift = params["beta"] - params["running_mean"] * scale
    wf = params["w_mat"] * scale[None, :]                       # (147, 64) f32
    w2 = jnp.zeros((2 * K, 2 * c_out), jnp.float32)
    w2 = w2.at[:K, :c_out].set(wf).at[K:, c_out:].set(wf)
    w2 = w2.astype(jnp.bfloat16)
    shift2 = jnp.concatenate([shift, shift]).reshape(1, 2 * c_out)
    shift2 = shift2.astype(jnp.float32)

    tm2 = min(tile_m2, _round_up(m2, 8))
    grid_m = pl.cdiv(m2, tm2)

    conv_out = pl.pallas_call(
        _conv_bn_relu_kernel,
        out_shape=jax.ShapeDtypeStruct((m2, 2 * c_out), jnp.float32),
        grid=(grid_m,),
        in_specs=[
            pl.BlockSpec((tm2, 2 * K), lambda i: (i, 0)),
            pl.BlockSpec((2 * K, 2 * c_out), lambda i: (0, 0)),   # resident
            pl.BlockSpec((1, 2 * c_out), lambda i: (0, 0)),       # resident
        ],
        out_specs=pl.BlockSpec((tm2, 2 * c_out), lambda i: (i, 0)),
        compiler_params=pltpu.CompilerParams(
            dimension_semantics=("parallel",)),
    )(patches2, w2, shift2)

    # (M/2, 128) row-major == lane-merged NHWC conv output: free reshape, no
    # HBM pad copy between conv and pool.
    y_merged = conv_out.reshape(n, ho, wo2, 2 * c_out)

    pooled = pl.pallas_call(
        _maxpool_kernel,
        out_shape=jax.ShapeDtypeStruct((n, ho2, wo2, c_out), jnp.float32),
        grid=(n,),
        in_specs=[pl.BlockSpec((None, ho, wo2, 2 * c_out),
                               lambda b: (b, 0, 0, 0))],
        out_specs=pl.BlockSpec((None, ho2, wo2, c_out),
                               lambda b: (b, 0, 0, 0)),
        scratch_shapes=[pltpu.VMEM((ho, wo2, c_out), jnp.float32),
                        pltpu.VMEM((ho2, wo2, c_out), jnp.float32)],
        compiler_params=pltpu.CompilerParams(
            dimension_semantics=("parallel",)),
    )(y_merged)
    # TODO(synk): for very large images also band the pool grid over output rows
    # with a carried 1-row halo so a whole image need not fit in VMEM.

    soft_mask_input = jnp.transpose(pooled, (0, 3, 1, 2))   # NHWC -> NCHW
    return soft_mask_input, targets


def reference_forward(person_nchw, obj_nchw, params):
    """Pure-JAX f32 reference of the same forward pass for correctness checking."""
    combined = person_nchw + obj_nchw
    sm = jnp.concatenate([person_nchw, obj_nchw, combined],
                         axis=1).astype(jnp.float32)
    x = jnp.transpose(sm, (0, 2, 3, 1))
    w_hwio = jnp.transpose(params["w_torch"], (2, 3, 1, 0))
    y = lax.conv_general_dilated(
        x, w_hwio, (CONV_STRIDE, CONV_STRIDE),
        padding=((CONV_PAD, CONV_PAD), (CONV_PAD, CONV_PAD)),
        dimension_numbers=("NHWC", "HWIO", "NHWC"),
        precision=lax.Precision.HIGHEST)
    scale = params["gamma"] / jnp.sqrt(params["running_var"] + BN_EPS)
    shift = params["beta"] - params["running_mean"] * scale
    y = jnp.maximum(y * scale + shift, 0.0)
    yp = lax.reduce_window(
        y, -jnp.inf, lax.max,
        (1, POOL_K, POOL_K, 1), (1, POOL_STRIDE, POOL_STRIDE, 1),
        ((0, 0), (POOL_PAD, POOL_PAD), (POOL_PAD, POOL_PAD), (0, 0)))
    return jnp.transpose(yp, (0, 3, 1, 2))


if __name__ == "__main__":
    key = jax.random.PRNGKey(0)
    kp, ko, kparam = jax.random.split(key, 3)

    N, H, W = 2, 16, 16
    # person_image_list.tensors / obj_image_list.tensors: single-channel masks, NCHW.
    person = jax.random.uniform(kp, (N, 1, H, W), jnp.float32)
    obj = jax.random.uniform(ko, (N, 1, H, W), jnp.float32)
    params = init_params(kparam)

    out, targets = jax.jit(mold_mask_inputs_vrb_forward)(person, obj, params)
    out = jax.block_until_ready(out)

    ref = reference_forward(person, obj, params)
    # bf16 MXU operands vs. the f32 reference -> loosened tolerance.
    np.testing.assert_allclose(np.asarray(out), np.asarray(ref),
                               rtol=3e-2, atol=3e-2)
    assert out.shape == (N, MASK_MOLD_FILTERS, H // 4, W // 4)
    assert targets is None
    print("KERNEL_OK")
</pallas_src>

<mosaic_0001>
module attributes {stable_mosaic.version = 11 : i64} {
  func.func @_conv_bn_relu_kernel(%arg0: i32, %arg1: memref<64x294xbf16, #tpu.memory_space<vmem>>, %arg2: memref<294x128xbf16, #tpu.memory_space<vmem>>, %arg3: memref<1x128xf32, #tpu.memory_space<vmem>>, %arg4: memref<64x128xf32, #tpu.memory_space<vmem>>) attributes {dimension_semantics = [#tpu.dimension_semantics<parallel>], iteration_bounds = array<i64: 1>, scalar_prefetch = 0 : i64, scratch_operands = 0 : i64, tpu.core_type = #tpu.core_type<tc>, window_params = [{transform_indices = @transform_0, window_bounds = array<i64: 64, 294>}, {pipeline_mode = #tpu.pipeline_mode<synchronous>, transform_indices = @transform_1, window_bounds = array<i64: 294, 128>}, {pipeline_mode = #tpu.pipeline_mode<synchronous>, transform_indices = @transform_2, window_bounds = array<i64: 1, 128>}, {transform_indices = @transform_3, window_bounds = array<i64: 64, 128>}]} {
    %c0 = arith.constant 0 : index
    %c0_0 = arith.constant 0 : index
    %0 = vector.load %arg1[%c0, %c0_0] : memref<64x294xbf16, #tpu.memory_space<vmem>>, vector<64x294xbf16>
    %c0_1 = arith.constant 0 : index
    %c0_2 = arith.constant 0 : index
    %1 = vector.load %arg2[%c0_1, %c0_2] : memref<294x128xbf16, #tpu.memory_space<vmem>>, vector<294x128xbf16>
    %cst = arith.constant dense<0.000000e+00> : vector<64x128xf32>
    %2 = tpu.matmul %0, %1, %cst {dimension_numbers = #tpu.dot_dimension_numbers<[1], [0], [0], [1], [0, 0, 1, 1], [], []>} : vector<64x294xbf16>, vector<294x128xbf16>, vector<64x128xf32> -> vector<64x128xf32>
    %c0_3 = arith.constant 0 : index
    %c0_4 = arith.constant 0 : index
    %3 = vector.load %arg3[%c0_3, %c0_4] : memref<1x128xf32, #tpu.memory_space<vmem>>, vector<1x128xf32>
    %4 = vector.broadcast %3 : vector<1x128xf32> to vector<64x128xf32>
    %5 = arith.addf %2, %4 : vector<64x128xf32>
    %cst_5 = arith.constant 0.000000e+00 : f32
    %6 = vector.broadcast %cst_5 : f32 to vector<64x128xf32>
    %7 = arith.maximumf %5, %6 : vector<64x128xf32>
    %c0_6 = arith.constant 0 : index
    %c0_7 = arith.constant 0 : index
    %8 = vector.load %arg4[%c0_6, %c0_7] : memref<64x128xf32, #tpu.memory_space<vmem>>, vector<64x128xf32>
    tpu.vector_store %arg4[%c0_6, %c0_7], %7 {strides = array<i32>} : memref<64x128xf32, #tpu.memory_space<vmem>>, vector<64x128xf32>,
    return
  }
  func.func @transform_0(%arg0: i32) -> (i32, i32) {
    %c0_i32 = arith.constant 0 : i32
    %c0_i32_0 = arith.constant 0 : i32
    return %arg0, %c0_i32 : i32, i32
  }
  func.func @transform_1(%arg0: i32) -> (i32, i32) {
    %c0_i32 = arith.constant 0 : i32
    %c0_i32_0 = arith.constant 0 : i32
    %c0_i32_1 = arith.constant 0 : i32
    return %c0_i32, %c0_i32_0 : i32, i32
  }
  func.func @transform_2(%arg0: i32) -> (i32, i32) {
    %c0_i32 = arith.constant 0 : i32
    %c0_i32_0 = arith.constant 0 : i32
    %c0_i32_1 = arith.constant 0 : i32
    return %c0_i32, %c0_i32_0 : i32, i32
  }
  func.func @transform_3(%arg0: i32) -> (i32, i32) {
    %c0_i32 = arith.constant 0 : i32
    %c0_i32_0 = arith.constant 0 : i32
    return %arg0, %c0_i32 : i32, i32
  }
}

module attributes {stable_mosaic.version = 11 : i64} {
  func.func @_maxpool_kernel(%arg0: i32, %arg1: memref<1x8x4x128xf32, #tpu.memory_space<vmem>>, %arg2: memref<1x4x4x64xf32, #tpu.memory_space<vmem>>, %arg3: memref<8x4x64xf32, #tpu.memory_space<vmem>>, %arg4: memref<4x4x64xf32, #tpu.memory_space<vmem>>) attributes {dimension_semantics = [#tpu.dimension_semantics<parallel>], iteration_bounds = array<i64: 2>, scalar_prefetch = 0 : i64, scratch_operands = 2 : i64, tpu.core_type = #tpu.core_type<tc>, window_params = [{transform_indices = @transform_0, window_bounds = array<i64: 1, 8, 4, 128>}, {transform_indices = @transform_1, window_bounds = array<i64: 1, 4, 4, 64>}]} {
    %c0 = arith.constant 0 : index
    %c0_0 = arith.constant 0 : index
    %c0_1 = arith.constant 0 : index
    %c0_2 = arith.constant 0 : index
    %0 = vector.load %arg1[%c0, %c0_0, %c0_1, %c0_2] : memref<1x8x4x128xf32, #tpu.memory_space<vmem>>, vector<1x8x4x64xf32>
    %1 = vector.shape_cast %0 : vector<1x8x4x64xf32> to vector<8x4x64xf32>
    %c0_3 = arith.constant 0 : index
    %c0_4 = arith.constant 0 : index
    %c0_5 = arith.constant 0 : index
    %c64 = arith.constant 64 : index
    %2 = vector.load %arg1[%c0_3, %c0_4, %c0_5, %c64] : memref<1x8x4x128xf32, #tpu.memory_space<vmem>>, vector<1x8x4x64xf32>
    %3 = vector.shape_cast %2 : vector<1x8x4x64xf32> to vector<8x4x64xf32>
    %4 = arith.maximumf %1, %3 : vector<8x4x64xf32>
    %cst = arith.constant 0.000000e+00 : f32
    %5 = vector.broadcast %cst : f32 to vector<8x4x64xf32>
    %c0_6 = arith.constant 0 : index
    %c0_7 = arith.constant 0 : index
    %c0_8 = arith.constant 0 : index
    %6 = vector.load %arg3[%c0_6, %c0_7, %c0_8] : memref<8x4x64xf32, #tpu.memory_space<vmem>>, vector<8x4x64xf32>
    tpu.vector_store %arg3[%c0_6, %c0_7, %c0_8], %5 {strides = array<i32>} : memref<8x4x64xf32, #tpu.memory_space<vmem>>, vector<8x4x64xf32>,
    %7 = vector.extract_strided_slice %3 {offsets = [0, 0, 0], sizes = [8, 3, 64], strides = [1, 1, 1]} : vector<8x4x64xf32> to vector<8x3x64xf32>
    %c0_9 = arith.constant 0 : index
    %c1 = arith.constant 1 : index
    %c0_10 = arith.constant 0 : index
    %8 = vector.load %arg3[%c0_9, %c1, %c0_10] : memref<8x4x64xf32, #tpu.memory_space<vmem>>, vector<8x3x64xf32>
    tpu.vector_store %arg3[%c0_9, %c1, %c0_10], %7 {strides = array<i32>} : memref<8x4x64xf32, #tpu.memory_space<vmem>>, vector<8x3x64xf32>,
    %c0_11 = arith.constant 0 : index
    %c0_12 = arith.constant 0 : index
    %c0_13 = arith.constant 0 : index
    %9 = vector.load %arg3[%c0_11, %c0_12, %c0_13] : memref<8x4x64xf32, #tpu.memory_space<vmem>>, vector<8x4x64xf32>
    %10 = arith.maximumf %4, %9 : vector<8x4x64xf32>
    %11 = vector.shape_cast %10 : vector<8x4x64xf32> to vector<4x2x4x64xf32>
    %12 = vector.extract_strided_slice %11 {offsets = [0, 0, 0, 0], sizes = [4, 1, 4, 64], strides = [1, 1, 1, 1]} : vector<4x2x4x64xf32> to vector<4x1x4x64xf32>
    %13 = vector.shape_cast %12 : vector<4x1x4x64xf32> to vector<4x4x64xf32>
    %14 = vector.extract_strided_slice %11 {offsets = [0, 1, 0, 0], sizes = [4, 1, 4, 64], strides = [1, 1, 1, 1]} : vector<4x2x4x64xf32> to vector<4x1x4x64xf32>
    %15 = vector.shape_cast %14 : vector<4x1x4x64xf32> to vector<4x4x64xf32>
    %16 = arith.maximumf %13, %15 : vector<4x4x64xf32>
    %cst_14 = arith.constant 0.000000e+00 : f32
    %17 = vector.broadcast %cst_14 : f32 to vector<4x4x64xf32>
    %c0_15 = arith.constant 0 : index
    %c0_16 = arith.constant 0 : index
    %c0_17 = arith.constant 0 : index
    %18 = vector.load %arg4[%c0_15, %c0_16, %c0_17] : memref<4x4x64xf32, #tpu.memory_space<vmem>>, vector<4x4x64xf32>
    tpu.vector_store %arg4[%c0_15, %c0_16, %c0_17], %17 {strides = array<i32>} : memref<4x4x64xf32, #tpu.memory_space<vmem>>, vector<4x4x64xf32>,
    %19 = vector.extract_strided_slice %15 {offsets = [0, 0, 0], sizes = [3, 4, 64], strides = [1, 1, 1]} : vector<4x4x64xf32> to vector<3x4x64xf32>
    %c1_18 = arith.constant 1 : index
    %c0_19 = arith.constant 0 : index
    %c0_20 = arith.constant 0 : index
    %20 = vector.load %arg4[%c1_18, %c0_19, %c0_20] : memref<4x4x64xf32, #tpu.memory_space<vmem>>, vector<3x4x64xf32>
    tpu.vector_store %arg4[%c1_18, %c0_19, %c0_20], %19 {strides = array<i32>} : memref<4x4x64xf32, #tpu.memory_space<vmem>>, vector<3x4x64xf32>,
    %c0_21 = arith.constant 0 : index
    %c0_22 = arith.constant 0 : index
    %c0_23 = arith.constant 0 : index
    %21 = vector.load %arg4[%c0_21, %c0_22, %c0_23] : memref<4x4x64xf32, #tpu.memory_space<vmem>>, vector<4x4x64xf32>
    %22 = arith.maximumf %16, %21 : vector<4x4x64xf32>
    %c0_24 = arith.constant 0 : index
    %c0_25 = arith.constant 0 : index
    %c0_26 = arith.constant 0 : index
    %c0_27 = arith.constant 0 : index
    %23 = vector.load %arg2[%c0_24, %c0_25, %c0_26, %c0_27] : memref<1x4x4x64xf32, #tpu.memory_space<vmem>>, vector<1x4x4x64xf32>
    %24 = vector.shape_cast %23 : vector<1x4x4x64xf32> to vector<4x4x64xf32>
    %25 = vector.shape_cast %22 : vector<4x4x64xf32> to vector<1x4x4x64xf32>
    tpu.vector_store %arg2[%c0_24, %c0_25, %c0_26, %c0_27], %25 {strides = array<i32>} : memref<1x4x4x64xf32, #tpu.memory_space<vmem>>, vector<1x4x4x64xf32>,
    return
  }
  func.func @transform_0(%arg0: i32) -> (i32, i32, i32, i32) {
    %c0_i32 = arith.constant 0 : i32
    %c0_i32_0 = arith.constant 0 : i32
    %c0_i32_1 = arith.constant 0 : i32
    %c0_i32_2 = arith.constant 0 : i32
    return %arg0, %c0_i32, %c0_i32_0, %c0_i32_1 : i32, i32, i32, i32
  }
  func.func @transform_1(%arg0: i32) -> (i32, i32, i32, i32) {
    %c0_i32 = arith.constant 0 : i32
    %c0_i32_0 = arith.constant 0 : i32
    %c0_i32_1 = arith.constant 0 : i32
    %c0_i32_2 = arith.constant 0 : i32
    return %arg0, %c0_i32, %c0_i32_0, %c0_i32_1 : i32, i32, i32, i32
  }
}

</mosaic_0001>

<llo_original>
// kernel: mold_mask_inputs_vrb_forward.2
$region0: #{mold_mask_inputs_vrb_forward.2}
  #allocation0 [shape = 'u32[]', space=smem, size = 0x4, offset = 0x4, fixed_abs, tag = 'smem constant byte address 0x4 - core index']
  #allocation1 [shape = 'u32[72,128]{1,0:T(1,128)}', space=vmem, size = 0x9000, scoped, tag = 'internal scratch']
  %s0 = inlined_call_operand.vmem [shape: bf16[64,294], index: 0, kind: input, shape index: {}]
  %s1 = inlined_call_operand.vmem [shape: bf16[294,128], index: 1, kind: input, shape index: {}]
  %s2 = inlined_call_operand.vmem [shape: f32[1,128], index: 2, kind: input, shape index: {}]
  %s3 = inlined_call_operand.vmem [shape: f32[64,128], index: 3, kind: output, shape index: {}]
  %s4 = sld [smem:[#allocation0]]
  $region22: #{mold_mask_inputs_vrb_forward.2} parent=0
    _
  %s6 = ssub.s32 1, %s4
  %s7 = scalar_select 0, %s6, %s4
  // Predicated region
  $region2: #{mold_mask_inputs_vrb_forward.2} parent=0 // pred_check
    _
  $region3: #{mold_mask_inputs_vrb_forward.2} parent=0 // pred_check_branch
    %9 = sbr.rel (0) target = $region5
  $region4: #{mold_mask_inputs_vrb_forward.2} parent=0 // pred_region
    _
  $region5: #{mold_mask_inputs_vrb_forward.2} parent=0 // pred_fallthru
    _
  // Predicated region
  $region6: #{mold_mask_inputs_vrb_forward.2} parent=0 // pred_check
    _
  $region7: #{mold_mask_inputs_vrb_forward.2} parent=0 // pred_check_branch
    %11 = sbr.rel (0) target = $region9
  $region8: #{mold_mask_inputs_vrb_forward.2} parent=0 // pred_region
    _
  $region9: #{mold_mask_inputs_vrb_forward.2} parent=0 // pred_fallthru
    _
  // Predicated region
  $region10: #{mold_mask_inputs_vrb_forward.2} parent=0 // pred_check
    _
  $region11: #{mold_mask_inputs_vrb_forward.2} parent=0 // pred_check_branch
    %13 = sbr.rel (0) target = $region13
  $region12: #{mold_mask_inputs_vrb_forward.2} parent=0 // pred_region
    _
  $region13: #{mold_mask_inputs_vrb_forward.2} parent=0 // pred_fallthru
    _
  %v15 = vld [vmem:[%s0] sm:$0xff]
  %v16 = vld [vmem:[%s0 + $0x8] sm:$0xf]
  %v17 = vld [vmem:[%s0 + $0xc] sm:$0xff]
  %v18 = vld [vmem:[%s0 + $0x14] sm:$0xf]
  %v19 = vld [vmem:[%s0 + $0x18] sm:$0xff]
  %v20 = vld [vmem:[%s0 + $0x20] sm:$0xf]
  %v21 = vld [vmem:[%s0 + $0x24] sm:$0xff]
  %v22 = vld [vmem:[%s0 + $0x2c] sm:$0xf]
  %v23 = vld [vmem:[%s0 + $0x30] sm:$0xff]
  %v24 = vld [vmem:[%s0 + $0x38] sm:$0xf]
  %v25 = vld [vmem:[%s0 + $0x3c] sm:$0xff]
  %v26 = vld [vmem:[%s0 + $0x44] sm:$0xf]
  %v27 = vld [vmem:[%s0 + $0x48] sm:$0xff]
  %v28 = vld [vmem:[%s0 + $0x50] sm:$0xf]
  %v29 = vld [vmem:[%s0 + $0x54] sm:$0xff]
  %v30 = vld [vmem:[%s0 + $0x5c] sm:$0xf]
  %v31 = vld [vmem:[%s1] sm:$0xf]
  %v32 = vld [vmem:[%s1 + $0x4] sm:$0xf]
  %v33 = vld [vmem:[%s1 + $0x8] sm:$0xf]
  %v34 = vld [vmem:[%s1 + $0xc] sm:$0xf]
  %v35 = vld [vmem:[%s1 + $0x10] sm:$0xf]
  %v36 = vld [vmem:[%s1 + $0x14] sm:$0xf]
  %v37 = vld [vmem:[%s1 + $0x18] sm:$0xf]
  %v38 = vld [vmem:[%s1 + $0x1c] sm:$0xf]
  %v39 = vld [vmem:[%s1 + $0x20] sm:$0xf]
  %v40 = vld [vmem:[%s1 + $0x24] sm:$0xf]
  %v41 = vld [vmem:[%s1 + $0x28] sm:$0xf]
  %v42 = vld [vmem:[%s1 + $0x2c] sm:$0xf]
  %v43 = vld [vmem:[%s1 + $0x30] sm:$0xf]
  %v44 = vld [vmem:[%s1 + $0x34] sm:$0xf]
  %v45 = vld [vmem:[%s1 + $0x38] sm:$0xf]
  %v46 = vld [vmem:[%s1 + $0x3c] sm:$0xf]
  %v47 = vld [vmem:[%s1 + $0x40] sm:$0xf]
  %v48 = vld [vmem:[%s1 + $0x44] sm:$0xf]
  %v49 = vld [vmem:[%s1 + $0x48] sm:$0xf]
  %v50 = vld [vmem:[%s1 + $0x4c] sm:$0xf]
  %v51 = vld [vmem:[%s1 + $0x50] sm:$0xf]
  %v52 = vld [vmem:[%s1 + $0x54] sm:$0xf]
  %v53 = vld [vmem:[%s1 + $0x58] sm:$0xf]
  %v54 = vld [vmem:[%s1 + $0x5c] sm:$0xf]
  %v55 = vld [vmem:[%s1 + $0x60] sm:$0xf]
  %v56 = vld [vmem:[%s1 + $0x64] sm:$0xf]
  %v57 = vld [vmem:[%s1 + $0x68] sm:$0xf]
  %v58 = vld [vmem:[%s1 + $0x6c] sm:$0xf]
  %v59 = vld [vmem:[%s1 + $0x70] sm:$0xf]
  %v60 = vld [vmem:[%s1 + $0x74] sm:$0xf]
  %v61 = vld [vmem:[%s1 + $0x78] sm:$0xf]
  %v62 = vld [vmem:[%s1 + $0x7c] sm:$0xf]
  %v63 = vld [vmem:[%s1 + $0x80] sm:$0xf]
  %v64 = vld [vmem:[%s1 + $0x84] sm:$0xf]
  %v65 = vld [vmem:[%s1 + $0x88] sm:$0xf]
  %v66 = vld [vmem:[%s1 + $0x8c] sm:$0xf]
  %v67 = vld [vmem:[%s1 + $0x90] sm:$0x7]
  %v68 = vld [vmem:[%s2] sm:$0x1]
  %v70 = vperm.slane %v68, 0
  %v88 = vunpack.c.l.b16 %v15
  %v89 = vunpack.c.h.b16 %v15
  %v90 = vunpack.c.l.b16 %v16
  %v91 = vunpack.c.l.b16 %v17
  %v92 = vunpack.c.h.b16 %v17
  %v93 = vunpack.c.l.b16 %v18
  %v94 = vunpack.c.l.b16 %v19
  %v95 = vunpack.c.h.b16 %v19
  %v96 = vunpack.c.l.b16 %v20
  %v97 = vunpack.c.l.b16 %v21
  %v98 = vunpack.c.h.b16 %v21
  %v99 = vunpack.c.l.b16 %v22
  %v100 = vunpack.c.l.b16 %v23
  %v101 = vunpack.c.h.b16 %v23
  %v102 = vunpack.c.l.b16 %v24
  %v103 = vunpack.c.l.b16 %v25
  %v104 = vunpack.c.h.b16 %v25
  %v105 = vunpack.c.l.b16 %v26
  %v106 = vunpack.c.l.b16 %v27
  %v107 = vunpack.c.h.b16 %v27
  %v108 = vunpack.c.l.b16 %v28
  %v109 = vunpack.c.l.b16 %v29
  %v110 = vunpack.c.h.b16 %v29
  %v111 = vunpack.c.l.b16 %v30
  %v112 = vpack.c.b16 %v91, %v88
  %v113 = vpack.c.b16 %v92, %v89
  %v114 = vpack.c.b16 %v93, %v90
  %v115 = vpack.c.b16 %v97, %v94
  %v116 = vpack.c.b16 %v98, %v95
  %v117 = vpack.c.b16 %v99, %v96
  %v118 = vpack.c.b16 %v103, %v100
  %v119 = vpack.c.b16 %v104, %v101
  %v120 = vpack.c.b16 %v105, %v102
  %v121 = vpack.c.b16 %v109, %v106
  %v122 = vpack.c.b16 %v110, %v107
  %v123 = vpack.c.b16 %v111, %v108
  %v169 = vunpack.c.l.b16 %v31
  %v170 = vunpack.c.l.b16 %v32
  %v171 = vunpack.c.l.b16 %v33
  %v172 = vunpack.c.l.b16 %v34
  %v173 = vunpack.c.l.b16 %v35
  %v174 = vunpack.c.l.b16 %v36
  %v175 = vunpack.c.l.b16 %v37
  %v176 = vunpack.c.l.b16 %v38
  %v177 = vunpack.c.l.b16 %v39
  %v178 = vunpack.c.l.b16 %v40
  %v179 = vunpack.c.l.b16 %v41
  %v180 = vunpack.c.l.b16 %v42
  %v181 = vunpack.c.l.b16 %v43
  %v182 = vunpack.c.l.b16 %v44
  %v183 = vunpack.c.l.b16 %v45
  %v184 = vunpack.c.l.b16 %v46
  %v185 = vunpack.c.l.b16 %v47
  %v186 = vunpack.c.l.b16 %v48
  %v187 = vunpack.c.l.b16 %v49
  %v188 = vunpack.c.l.b16 %v50
  %v189 = vunpack.c.l.b16 %v51
  %v190 = vunpack.c.l.b16 %v52
  %v191 = vunpack.c.l.b16 %v53
  %v192 = vunpack.c.l.b16 %v54
  %v193 = vunpack.c.l.b16 %v55
  %v194 = vunpack.c.l.b16 %v56
  %v195 = vunpack.c.l.b16 %v57
  %v196 = vunpack.c.l.b16 %v58
  %v197 = vunpack.c.l.b16 %v59
  %v198 = vunpack.c.l.b16 %v60
  %v199 = vunpack.c.l.b16 %v61
  %v200 = vunpack.c.l.b16 %v62
  %v201 = vunpack.c.l.b16 %v63
  %v202 = vunpack.c.l.b16 %v64
  %v203 = vunpack.c.l.b16 %v65
  %v204 = vunpack.c.l.b16 %v66
  %v205 = vunpack.c.l.b16 %v67
  %v206 = vpack.c.b16 %v170, %v169
  %v207 = vpack.c.b16 %v172, %v171
  %v208 = vpack.c.b16 %v174, %v173
  %v209 = vpack.c.b16 %v176, %v175
  %v210 = vpack.c.b16 %v178, %v177
  %v211 = vpack.c.b16 %v180, %v179
  %v212 = vpack.c.b16 %v182, %v181
  %v213 = vpack.c.b16 %v184, %v183
  %v214 = vpack.c.b16 %v186, %v185
  %v215 = vpack.c.b16 %v188, %v187
  %v216 = vpack.c.b16 %v190, %v189
  %v217 = vpack.c.b16 %v192, %v191
  %v218 = vpack.c.b16 %v194, %v193
  %v219 = vpack.c.b16 %v196, %v195
  %v220 = vpack.c.b16 %v198, %v197
  %v221 = vpack.c.b16 %v200, %v199
  %v222 = vpack.c.b16 %v202, %v201
  %v223 = vpack.c.b16 %v204, %v203
  %v224 = vpack.c.b16 %v205, %v205
  %vm243 = vcmask 310272
  %v245 = vsel %vm243, %v114, 0
  %v248 = vsel %vm243, %v117, 0
  %v251 = vsel %vm243, %v120, 0
  %v254 = vsel %vm243, %v123, 0
  %vm256 = vcmask 1042432
  %v258 = vsel %vm256, %v224, 0
  %260 = vmatpush.bf16.msra.mxu0 %v213
  %261 = vmatpush.bf16.msra.mxu0 %v212
  %262 = vmatpush.bf16.msra.mxu0 %v211
  %263 = vmatpush.bf16.msra.mxu0 %v210
  %264 = vmatpush.bf16.msra.mxu0 %v209
  %265 = vmatpush.bf16.msra.mxu0 %v208
  %266 = vmatpush.bf16.msra.mxu0 %v207
  %267 = vmatpush.bf16.msra.mxu0 %v206
  %268 = vmatmul.bf16.gmra.mxu0 %v112
  %v269 = vpop.f32.mrf.mxu0
  %v270 = vadd.f32 %v70, %v269
  %v271 = vpop.f32.mrf.mxu0
  %v272 = vadd.f32 %v70, %v271
  %273 = vmatmul.bf16.gmra.mxu0 %v115
  %v274 = vpop.f32.mrf.mxu0
  %v275 = vadd.f32 %v70, %v274
  %v276 = vpop.f32.mrf.mxu0
  %v277 = vadd.f32 %v70, %v276
  %278 = vmatmul.bf16.gmra.mxu0 %v118
  %v279 = vpop.f32.mrf.mxu0
  %v280 = vadd.f32 %v70, %v279
  %v281 = vpop.f32.mrf.mxu0
  %v282 = vadd.f32 %v70, %v281
  %283 = vmatmul.bf16.gmra.mxu0 %v121
  %v284 = vpop.f32.mrf.mxu0
  %v285 = vadd.f32 %v70, %v284
  %v286 = vpop.f32.mrf.mxu0
  %v287 = vadd.f32 %v70, %v286
  %288 = vdwg.mxu0
  %289 = vmatpush.bf16.msra.mxu0 %v221
  %290 = vmatpush.bf16.msra.mxu0 %v220
  %291 = vmatpush.bf16.msra.mxu0 %v219
  %292 = vmatpush.bf16.msra.mxu0 %v218
  %293 = vmatpush.bf16.msra.mxu0 %v217
  %294 = vmatpush.bf16.msra.mxu0 %v216
  %295 = vmatpush.bf16.msra.mxu0 %v215
  %296 = vmatpush.bf16.msra.mxu0 %v214
  %297 = vmatmul.bf16.gmra.mxu0 %v113
  %v298 = vpop.f32.mrf.mxu0
  %v299 = vadd.f32 %v270, %v298
  %v300 = vpop.f32.mrf.mxu0
  %v301 = vadd.f32 %v272, %v300
  %302 = vmatmul.bf16.gmra.mxu0 %v116
  %v303 = vpop.f32.mrf.mxu0
  %v304 = vadd.f32 %v275, %v303
  %v305 = vpop.f32.mrf.mxu0
  %v306 = vadd.f32 %v277, %v305
  %307 = vmatmul.bf16.gmra.mxu0 %v119
  %v308 = vpop.f32.mrf.mxu0
  %v309 = vadd.f32 %v280, %v308
  %v310 = vpop.f32.mrf.mxu0
  %v311 = vadd.f32 %v282, %v310
  %312 = vmatmul.bf16.gmra.mxu0 %v122
  %v313 = vpop.f32.mrf.mxu0
  %v314 = vadd.f32 %v285, %v313
  %v315 = vpop.f32.mrf.mxu0
  %v316 = vadd.f32 %v287, %v315
  %317 = vdwg.mxu0
  %318 = vmatpush.bf16.msra.mxu0 0
  %319 = vmatpush.bf16.msra.mxu0 0
  %320 = vmatpush.bf16.msra.mxu0 0
  %321 = vmatpush.bf16.msra.mxu0 0
  %322 = vmatpush.bf16.msra.mxu0 0
  %323 = vmatpush.bf16.msra.mxu0 %v258
  %324 = vmatpush.bf16.msra.mxu0 %v223
  %325 = vmatpush.bf16.msra.mxu0 %v222
  %326 = vmatmul.bf16.gmra.mxu0 %v245
  %v327 = vpop.f32.mrf.mxu0
  %v328 = vadd.f32 %v299, %v327
  %v329 = vpop.f32.mrf.mxu0
  %v330 = vadd.f32 %v301, %v329
  %331 = vmatmul.bf16.gmra.mxu0 %v248
  %v332 = vpop.f32.mrf.mxu0
  %v333 = vadd.f32 %v304, %v332
  %v334 = vpop.f32.mrf.mxu0
  %v335 = vadd.f32 %v306, %v334
  %336 = vmatmul.bf16.gmra.mxu0 %v251
  %v337 = vpop.f32.mrf.mxu0
  %v338 = vadd.f32 %v309, %v337
  %v339 = vpop.f32.mrf.mxu0
  %v340 = vadd.f32 %v311, %v339
  %341 = vmatmul.bf16.gmra.mxu0 %v254
  %v342 = vpop.f32.mrf.mxu0
  %v343 = vadd.f32 %v314, %v342
  %v344 = vpop.f32.mrf.mxu0
  %v345 = vadd.f32 %v316, %v344
  %346 = vdwg.mxu0
  %v347 = vmax.f32 %v328, 0.0
  %v348 = vmax.f32 %v330, 0.0
  %v349 = vmax.f32 %v333, 0.0
  %v350 = vmax.f32 %v335, 0.0
  %v351 = vmax.f32 %v338, 0.0
  %v352 = vmax.f32 %v340, 0.0
  %v353 = vmax.f32 %v343, 0.0
  %v354 = vmax.f32 %v345, 0.0
  %355 = vst [vmem:[%s3] sm:$0xff] %v347
  %356 = vst [vmem:[%s3 + $0x8] sm:$0xff] %v348
  %357 = vst [vmem:[%s3 + $0x10] sm:$0xff] %v349
  %358 = vst [vmem:[%s3 + $0x18] sm:$0xff] %v350
  %359 = vst [vmem:[%s3 + $0x20] sm:$0xff] %v351
  %360 = vst [vmem:[%s3 + $0x28] sm:$0xff] %v352
  %361 = vst [vmem:[%s3 + $0x30] sm:$0xff] %v353
  %362 = vst [vmem:[%s3 + $0x38] sm:$0xff] %v354
  // Predicated region
  $region14: #{mold_mask_inputs_vrb_forward.2} parent=0 // pred_check
    _
  $region15: #{mold_mask_inputs_vrb_forward.2} parent=0 // pred_check_branch
    %364 = sbr.rel (0) target = $region17
  $region16: #{mold_mask_inputs_vrb_forward.2} parent=0 // pred_region
    _
  $region17: #{mold_mask_inputs_vrb_forward.2} parent=0 // pred_fallthru
    _
  // Predicated region
  $region18: #{mold_mask_inputs_vrb_forward.2} parent=0 // pred_check
    _
  $region19: #{mold_mask_inputs_vrb_forward.2} parent=0 // pred_check_branch
    %366 = sbr.rel (0) target = $region21
  $region20: #{mold_mask_inputs_vrb_forward.2} parent=0 // pred_region
    _
  $region21: #{mold_mask_inputs_vrb_forward.2} parent=0 // pred_fallthru
    _

// kernel: mold_mask_inputs_vrb_forward.3
$region0: #{mold_mask_inputs_vrb_forward.3}
  #allocation0 [shape = 'u32[]', space=smem, size = 0x4, offset = 0x4, fixed_abs, tag = 'smem constant byte address 0x4 - core index']
  #allocation1 [shape = 'u32[72,128]{1,0:T(1,128)}', space=vmem, size = 0x9000, scoped, tag = 'internal scratch']
  #allocation2 [shape = 'f32[8,4,64]{2,1,0:T(4,128)}', space=vmem, size = 0x4000, scoped, tag = 'scratch operand']
  #allocation3 [shape = 'f32[4,4,64]{2,1,0:T(4,128)}', space=vmem, size = 0x2000, scoped, tag = 'scratch operand']
  %s0 = inlined_call_operand.vmem [shape: f32[2,8,4,128], index: 0, kind: input, shape index: {}]
  %s1 = inlined_call_operand.hbm [shape: f32[2,4,4,64], index: 1, kind: output, shape index: {}]
  %s2 = sld [smem:[#allocation0]]
  $region37: #{mold_mask_inputs_vrb_forward.3} parent=0
    _
  %s4 = ssub.s32 1, %s2
  %s5 = scalar_select 0, %s4, %s2
  $region1: #{mold_mask_inputs_vrb_forward.3} parent=0
    #allocation4 [shape = 'u8[16384]{0}', space=vmem, size = 0x4000, scoped, tag = 'output window, operand 0']
    #allocation5 [shape = 's32[2]{0}', space=sflag, size = 0x8, scoped, tag = 'scoped memory for mold_mask_inputs_vrb_forward.3']
    %6 = vsyncpa [#allocation5], 0
    %s7 = scalar_lea.sflag [#allocation5], 1
    %8 = vsyncpa %s7, 0
    loop: start=0, step=1, limit=4
    $region2: #{mold_mask_inputs_vrb_forward.3} parent=1 // loop_pre_header
      _
    $region3: #{mold_mask_inputs_vrb_forward.3} parent=1 // loop_header
      %s10 = sphi 0, %s14
      %p11 = scmp.ge.s32.totalorder %s10, 4
      %s20 = sphi 0, %s22
      %s23 = sphi 0, %s20
      %s24 = sphi 0, %s23
      %s40 = sphi 0, %s24
      %s46 = sphi 0, %s48
      %s49 = sphi 0, %s46
      %s50 = sphi 0, %s49
      %s66 = sphi 0, %s50
    $region4: #{mold_mask_inputs_vrb_forward.3} parent=1 // loop_header_branch
      %13 = sbr.rel (%p11) target = $region8
    $region5: #{mold_mask_inputs_vrb_forward.3} parent=1 // loop_body
      %s15 = ssub.s32 %s10, 1
      %s16 = ssub.s32 %s10, 2
      %s17 = sadd.s32 %s10, 1
      %s18 = ssub.s32 %s10, %s17
      %p19 = scmp.eq.s32.totalorder %s18, 0
      %s21 = sadd.s32 %s20, 1
      %s22 = scalar_select %p19, %s20, %s21
      %p25 = pneg %p19
      %p26 = scmp.eq.s32.totalorder %s10, 1
      %p27 = por %p25, %p26
      %p28 = scmp.ne.s32.totalorder %s20, %s23
      %p29 = scmp.eq.s32.totalorder %s10, 0
      %p30 = por %p28, %p29
      %p31 = scmp.ne.s32.totalorder %s20, %s23
      %p32 = scmp.eq.s32.totalorder %s15, 1
      %p33 = por %p31, %p32
      %p34 = scmp.ne.s32.totalorder %s23, %s24
      %p35 = scmp.eq.s32.totalorder %s15, 0
      %p36 = por %p34, %p35
      %p37 = scmp.ne.s32.totalorder %s23, %s24
      %p38 = scmp.eq.s32.totalorder %s16, 1
      %p39 = por %p37, %p38
      %p41 = scmp.ne.s32.totalorder %s24, %s40
      %p42 = scmp.eq.s32.totalorder %s16, 0
      %p43 = por %p41, %p42
      %s44 = ssub.s32 %s10, %s17
      %p45 = scmp.eq.s32.totalorder %s44, 0
      %s47 = sadd.s32 %s46, 1
      %s48 = scalar_select %p45, %s46, %s47
      %p51 = pneg %p45
      %p52 = scmp.eq.s32.totalorder %s10, 1
      %p53 = por %p51, %p52
      %p54 = scmp.ne.s32.totalorder %s46, %s49
      %p55 = scmp.eq.s32.totalorder %s10, 0
      %p56 = por %p54, %p55
      %p57 = scmp.ne.s32.totalorder %s46, %s49
      %p58 = scmp.eq.s32.totalorder %s15, 1
      %p59 = por %p57, %p58
      %p60 = scmp.ne.s32.totalorder %s49, %s50
      %p61 = scmp.eq.s32.totalorder %s15, 0
      %p62 = por %p60, %p61
      %p63 = scmp.ne.s32.totalorder %s49, %s50
      %p64 = scmp.eq.s32.totalorder %s16, 1
      %p65 = por %p63, %p64
      %p67 = scmp.ne.s32.totalorder %s50, %s66
      %p68 = scmp.eq.s32.totalorder %s16, 0
      %p69 = por %p67, %p68
      %p70 = scmp.le.s32.totalorder 1, %s10
      %p71 = scmp.lt.s32.totalorder %s10, 3
      %p72 = pnand %p70, %p71
      %p73 = pneg %p72
      // Predicated region
      $region9: #{mold_mask_inputs_vrb_forward.3} parent=5 // pred_check
        _
      $region10: #{mold_mask_inputs_vrb_forward.3} parent=5 // pred_check_branch
        %75 = sbr.rel (%p72) target = $region12
      $region11: #{mold_mask_inputs_vrb_forward.3} parent=5 // pred_region
        %s76 = ssub.s32 %s10, 1
      $region12: #{mold_mask_inputs_vrb_forward.3} parent=5 // pred_fallthru
        _
      %p77 = scmp.lt.s32.totalorder %s10, 2
      // Predicated region
      $region13: #{mold_mask_inputs_vrb_forward.3} parent=5 // pred_check
        %p78 = pneg %p77
      $region14: #{mold_mask_inputs_vrb_forward.3} parent=5 // pred_check_branch
        %80 = sbr.rel (%p78) target = $region16
      $region15: #{mold_mask_inputs_vrb_forward.3} parent=5 // pred_region
        // Predicated region
        $region17: #{mold_mask_inputs_vrb_forward.3} parent=15 // pred_check
          %p81 = pneg %p30
        $region18: #{mold_mask_inputs_vrb_forward.3} parent=15 // pred_check_branch
          %83 = sbr.rel (%p81) target = $region20
        $region19: #{mold_mask_inputs_vrb_forward.3} parent=15 // pred_region
          %p84 = scmp.lt.s32.totalorder %s10, 1
          %s85 = scalar_select %p84, %s10, 1
          %s86 = smul.addr %s85, 8
          %s87 = smul.addr %s86, 4
          %s88 = scalar_lea.vmem %s0, %s87
        $region20: #{mold_mask_inputs_vrb_forward.3} parent=15 // pred_fallthru
          _
      $region16: #{mold_mask_inputs_vrb_forward.3} parent=5 // pred_fallthru
        _
      %p89 = scmp.le.s32.totalorder 1, %s10
      %p90 = scmp.lt.s32.totalorder %s10, 3
      %p91 = pnand %p89, %p90
      %p92 = pneg %p91
      // Predicated region
      $region21: #{mold_mask_inputs_vrb_forward.3} parent=5 // pred_check
        _
      $region22: #{mold_mask_inputs_vrb_forward.3} parent=5 // pred_check_branch
        %94 = sbr.rel (%p91) target = $region24
      $region23: #{mold_mask_inputs_vrb_forward.3} parent=5 // pred_region
        %s95 = ssub.s32 %s10, 1
        %p96 = scmp.lt.s32.totalorder %s15, 1
        %s97 = scalar_select %p96, %s15, 1
        %s98 = smul.addr %s97, 8
        %s99 = smul.addr %s98, 4
        %s100 = scalar_lea.vmem %s0, %s99
        %p101 = pneg %p36
        %p102 = pneg %p33
        %p103 = pneg %p62
        %p104 = pneg %p59
        %s105 = sand.u32 %s49, 1
        %s106 = scalar_lea.sflag [#allocation5], %s105
        %s107 = sand.u32 %s49, 1
        %s108 = smul.addr %s107, 16
        %s109 = scalar_lea.vmem [#allocation4], %s108
        %p110 = scmp.lt.s32.totalorder %s15, 1
        %s111 = scalar_select %p110, %s15, 1
        %s112 = smul.addr %s111, 8
        %s113 = smul.addr %s112, 4
        %s114 = scalar_lea.vmem %s0, %s113
        %v115 = vld [vmem:[%s114] sm:$0xf]
        %v116 = vld [vmem:[%s114 + $0x4] sm:$0xf]
        %v117 = vld [vmem:[%s114 + $0x8] sm:$0xf]
        %v118 = vld [vmem:[%s114 + $0xc] sm:$0xf]
        %v119 = vld [vmem:[%s114 + $0x10] sm:$0xf]
        %v120 = vld [vmem:[%s114 + $0x14] sm:$0xf]
        %v121 = vld [vmem:[%s114 + $0x18] sm:$0xf]
        %v122 = vld [vmem:[%s114 + $0x1c] sm:$0xf]
        %131 = vrot.lane.b32.xlu0 %v115, 64
        %v132 = vpop.permute.xlu0 %131
        %133 = vrot.lane.b32.xlu0 %v116, 64
        %v134 = vpop.permute.xlu0 %133
        %135 = vrot.lane.b32.xlu0 %v117, 64
        %v136 = vpop.permute.xlu0 %135
        %137 = vrot.lane.b32.xlu0 %v118, 64
        %v138 = vpop.permute.xlu0 %137
        %139 = vrot.lane.b32.xlu0 %v119, 64
        %v140 = vpop.permute.xlu0 %139
        %141 = vrot.lane.b32.xlu0 %v120, 64
        %v142 = vpop.permute.xlu0 %141
        %143 = vrot.lane.b32.xlu0 %v121, 64
        %v144 = vpop.permute.xlu0 %143
        %145 = vrot.lane.b32.xlu0 %v122, 64
        %v146 = vpop.permute.xlu0 %145
        %v155 = vmax.f32 %v115, %v132
        %v156 = vmax.f32 %v116, %v134
        %v157 = vmax.f32 %v117, %v136
        %v158 = vmax.f32 %v118, %v138
        %v159 = vmax.f32 %v119, %v140
        %v160 = vmax.f32 %v120, %v142
        %v161 = vmax.f32 %v121, %v144
        %v162 = vmax.f32 %v122, %v146
        %vm163 = vcmask 519168
        %164 = vst.msk [vmem:[#allocation2] sm:$0xf] %vm163, 0.0
        %165 = vst.msk [vmem:[#allocation2 + $0x4] sm:$0xf] %vm163, 0.0
        %166 = vst.msk [vmem:[#allocation2 + $0x8] sm:$0xf] %vm163, 0.0
        %167 = vst.msk [vmem:[#allocation2 + $0xc] sm:$0xf] %vm163, 0.0
        %168 = vst.msk [vmem:[#allocation2 + $0x10] sm:$0xf] %vm163, 0.0
        %169 = vst.msk [vmem:[#allocation2 + $0x14] sm:$0xf] %vm163, 0.0
        %170 = vst.msk [vmem:[#allocation2 + $0x18] sm:$0xf] %vm163, 0.0
        %171 = vst.msk [vmem:[#allocation2 + $0x1c] sm:$0xf] %vm163, 0.0
        %vm172 = vcmask 518144
        %173 = vst.msk [vmem:[#allocation2 + $0x1] sm:$0x7] %vm172, %v132
        %174 = vst.msk [vmem:[#allocation2 + $0x5] sm:$0x7] %vm172, %v134
        %175 = vst.msk [vmem:[#allocation2 + $0x9] sm:$0x7] %vm172, %v136
        %176 = vst.msk [vmem:[#allocation2 + $0xd] sm:$0x7] %vm172, %v138
        %177 = vst.msk [vmem:[#allocation2 + $0x11] sm:$0x7] %vm172, %v140
        %178 = vst.msk [vmem:[#allocation2 + $0x15] sm:$0x7] %vm172, %v142
        %179 = vst.msk [vmem:[#allocation2 + $0x19] sm:$0x7] %vm172, %v144
        %180 = vst.msk [vmem:[#allocation2 + $0x1d] sm:$0x7] %vm172, %v146
        %v181 = vld [vmem:[#allocation2] sm:$0xf]
        %v182 = vld [vmem:[#allocation2 + $0x4] sm:$0xf]
        %v183 = vld [vmem:[#allocation2 + $0x8] sm:$0xf]
        %v184 = vld [vmem:[#allocation2 + $0xc] sm:$0xf]
        %v185 = vld [vmem:[#allocation2 + $0x10] sm:$0xf]
        %v186 = vld [vmem:[#allocation2 + $0x14] sm:$0xf]
        %v187 = vld [vmem:[#allocation2 + $0x18] sm:$0xf]
        %v188 = vld [vmem:[#allocation2 + $0x1c] sm:$0xf]
        %v189 = vmax.f32 %v155, %v181
        %v190 = vmax.f32 %v156, %v182
        %v191 = vmax.f32 %v157, %v183
        %v192 = vmax.f32 %v158, %v184
        %v193 = vmax.f32 %v159, %v185
        %v194 = vmax.f32 %v160, %v186
        %v195 = vmax.f32 %v161, %v187
        %v196 = vmax.f32 %v162, %v188
        %v197 = vmax.f32 %v189, %v190
        %v198 = vmax.f32 %v191, %v192
        %v199 = vmax.f32 %v193, %v194
        %v200 = vmax.f32 %v195, %v196
        %201 = vst.msk [vmem:[#allocation3] sm:$0xf] %vm163, 0.0
        %202 = vst.msk [vmem:[#allocation3 + $0x4] sm:$0xf] %vm163, 0.0
        %203 = vst.msk [vmem:[#allocation3 + $0x8] sm:$0xf] %vm163, 0.0
        %204 = vst.msk [vmem:[#allocation3 + $0xc] sm:$0xf] %vm163, 0.0
        %s205 = scalar_lea.vmem [#allocation3], 4
        %206 = vst.msk [vmem:[%s205] sm:$0xf] %vm163, %v190
        %207 = vst.msk [vmem:[%s205 + $0x4] sm:$0xf] %vm163, %v192
        %208 = vst.msk [vmem:[%s205 + $0x8] sm:$0xf] %vm163, %v194
        %v209 = vld [vmem:[#allocation3] sm:$0xf]
        %v210 = vld [vmem:[#allocation3 + $0x4] sm:$0xf]
        %v211 = vld [vmem:[#allocation3 + $0x8] sm:$0xf]
        %v212 = vld [vmem:[#allocation3 + $0xc] sm:$0xf]
        %v213 = vmax.f32 %v197, %v209
        %v214 = vmax.f32 %v198, %v210
        %v215 = vmax.f32 %v199, %v211
        %v216 = vmax.f32 %v200, %v212
        %217 = vst.msk [vmem:[%s109] sm:$0xf] %vm163, %v213
        %218 = vst.msk [vmem:[%s109 + $0x4] sm:$0xf] %vm163, %v214
        %219 = vst.msk [vmem:[%s109 + $0x8] sm:$0xf] %vm163, %v215
        %220 = vst.msk [vmem:[%s109 + $0xc] sm:$0xf] %vm163, %v216
        %s221 = sand.u32 %s49, 1
        %s222 = scalar_lea.sflag [#allocation5], %s221
        %s223 = sand.u32 %s49, 1
        %s224 = smul.addr %s223, 16
        %s225 = scalar_lea.vmem [#allocation4], %s224
        // Predicated region
        $region25: #{mold_mask_inputs_vrb_forward.3} parent=23 // pred_check
          %p226 = pneg %p59
        $region26: #{mold_mask_inputs_vrb_forward.3} parent=23 // pred_check_branch
          %228 = sbr.rel (%p226) target = $region28
        $region27: #{mold_mask_inputs_vrb_forward.3} parent=23 // pred_region
          %230 = vsyncadd %s222, 0
          %s231 = smul.addr %s15, 4
          %s232 = smul.addr %s231, 4
          %s233 = scalar_lea.hbm %s1, %s232
          %s234 = sshll.u32 %s225, 4
          %s235 = int_to_ptr.vmem [resolvable:$true] %s234
          %s236 = sshll.u32 %s233, 4
          %s237 = int_to_ptr.hbm [resolvable:$true] %s236
          %242 = dma.vmem_to_hbm [thread:$0]  %s235, 256, %s237, %s222, 64, 64, 4
        $region28: #{mold_mask_inputs_vrb_forward.3} parent=23 // pred_fallthru
          _
      $region24: #{mold_mask_inputs_vrb_forward.3} parent=5 // pred_fallthru
        _
      %p243 = scmp.le.s32.totalorder 2, %s10
      // Predicated region
      $region29: #{mold_mask_inputs_vrb_forward.3} parent=5 // pred_check
        %p244 = pneg %p243
      $region30: #{mold_mask_inputs_vrb_forward.3} parent=5 // pred_check_branch
        %246 = sbr.rel (%p244) target = $region32
      $region31: #{mold_mask_inputs_vrb_forward.3} parent=5 // pred_region
        %s247 = ssub.s32 %s10, 2
        // Predicated region
        $region33: #{mold_mask_inputs_vrb_forward.3} parent=31 // pred_check
          %p248 = pneg %p65
        $region34: #{mold_mask_inputs_vrb_forward.3} parent=31 // pred_check_branch
          %250 = sbr.rel (%p248) target = $region36
        $region35: #{mold_mask_inputs_vrb_forward.3} parent=31 // pred_region
          %s251 = sand.u32 %s50, 1
          %s252 = scalar_lea.sflag [#allocation5], %s251
          %s253 = sand.u32 %s50, 1
          %s254 = smul.addr %s253, 16
          %s255 = scalar_lea.vmem [#allocation4], %s254
          %257 = dma.done %s252, 256
        $region36: #{mold_mask_inputs_vrb_forward.3} parent=31 // pred_fallthru
          _
      $region32: #{mold_mask_inputs_vrb_forward.3} parent=5 // pred_fallthru
        _
    $region6: #{mold_mask_inputs_vrb_forward.3} parent=1 // loop_footer
      %s14 = sadd.s32 1, %s10
    $region7: #{mold_mask_inputs_vrb_forward.3} parent=1 // loop_footer_branch
      %9 = sbr.rel target = $region3
    $region8: #{mold_mask_inputs_vrb_forward.3} parent=1 // loop_exit
      _
    %258 = vsyncpa [#allocation5], 1
    %s259 = scalar_lea.sflag [#allocation5], 1
    %260 = vsyncpa %s259, 1

</llo_original>
